<compile_context>
chip_gen: v5e
topology: v5e:2x2
jax: 0.10.0
libtpu: 0.0.40
codegen_flags: <defaults>
</compile_context>

<pallas_src>
import math

import jax
import jax.numpy as jnp
from jax.experimental import pallas as pl
from jax.experimental.pallas import tpu as pltpu

_LANE = 128
_SUBLANE = 8


def _round_up(x, m):
    return (x + m - 1) // m * m


def _pad_dim(d):
    # Lane-dense feature padding.  128 fills v5e's 128x128 MXU and is optimal
    # for the small dims used here; for layers genuinely wider than 128 a
    # 256-multiple pad would better fill v6e/v7x's 256-wide MXU.
    return _round_up(d, _LANE)


def _vmem_capacity_bytes():
    try:
        return int(pltpu.get_tpu_info().vmem_capacity_bytes)
    except Exception:
        return 64 * 1024 * 1024  # conservative: v7x per-TensorCore VMEM


# ----------------------------------------------------------------------------
# Kernel
# ----------------------------------------------------------------------------
def _make_fcnet_kernel(num_layers, d_in, d_out, np_last, needs_in_pad):
    """Fused forward kernel for a fixed (static) number of layers."""

    def kernel(*refs):
        x_ref = refs[0]                                   # (tb, d_in)      f32
        v_refs = refs[1:1 + num_layers]                   # (Kp_l, Np_l)    bf16
        b_refs = refs[1 + num_layers:1 + 2 * num_layers]  # (1, Np_l)       f32
        o_ref = refs[1 + 2 * num_layers]                  # (tb, d_out)     f32

        if needs_in_pad:
            # Zero-extend the real input columns to the padded width inside
            # VMEM (zeroed every step: scratch is per-core, so a one-shot
            # program_id==0 init would be wrong under megacore sharding).
            xp_ref = refs[2 + 2 * num_layers]             # (tb, Kp_0)      f32
            xp_ref[...] = jnp.zeros_like(xp_ref)
            xp_ref[:, :d_in] = x_ref[...].astype(jnp.float32)
            h = xp_ref[...]
        else:
            h = x_ref[...].astype(jnp.float32)

        # Static unroll: L is small here.  For deep homogeneous stacks use a
        # stacked (L, Dp, Dp) layout + lax.fori_loop to bound live ranges.
        for l in range(num_layers):
            # bf16 x bf16 MXU matmul, f32 accumulation; weight-norm scale is
            # already folded into v_refs at pack time.
            y = jnp.dot(h.astype(jnp.bfloat16), v_refs[l][...],
                        preferred_element_type=jnp.float32)
            h = jnp.maximum(y + b_refs[l][...], 0.0)      # f32 epilogue

        if d_out != np_last:
            h = h[:, :d_out]
        o_ref[...] = h.astype(o_ref.dtype)

    return kernel


# ----------------------------------------------------------------------------
# Parameter packing
# ----------------------------------------------------------------------------
def init_fcnet_params(dims, key):
    """PyTorch-style init: nn.Linear U(-1/sqrt(fan_in)) + weight_norm(dim=None)."""
    params = []
    for i in range(len(dims) - 1):
        in_dim, out_dim = dims[i], dims[i + 1]
        key, kw, kb, kg = jax.random.split(key, 4)
        bound = 1.0 / math.sqrt(in_dim)
        v = jax.random.uniform(kw, (out_dim, in_dim), jnp.float32,
                               minval=-bound, maxval=bound)
        b = jax.random.uniform(kb, (out_dim,), jnp.float32,
                               minval=-bound, maxval=bound)
        # weight_norm init sets g = ||V||_F; perturb so the scaling path is
        # actually exercised.
        g = jnp.sqrt(jnp.sum(v * v)) * jax.random.uniform(
            kg, (), jnp.float32, minval=0.5, maxval=1.5)
        params.append((v, g, b))
    return params


def pack_fcnet_params(params):
    """Per-layer lane-dense padding.  Weight-norm scale g/||V||_F is folded
    into the packed weights (bf16, transposed to (in, out)); biases stay f32."""
    v_list, b_list = [], []
    for (v, g, bias) in params:
        out_dim, in_dim = v.shape
        kp, np_ = _pad_dim(in_dim), _pad_dim(out_dim)
        v32 = v.astype(jnp.float32)
        scale = g.astype(jnp.float32) / jnp.sqrt(jnp.sum(v32 * v32))
        w = (v32 * scale).T                               # fold scale, (in, out)
        wp = jnp.zeros((kp, np_), jnp.float32).at[:in_dim, :out_dim].set(w)
        v_list.append(wp.astype(jnp.bfloat16))
        bp = jnp.zeros((1, np_), jnp.float32).at[0, :out_dim].set(
            bias.astype(jnp.float32))
        b_list.append(bp)
    return v_list, b_list


# ----------------------------------------------------------------------------
# Forward
# ----------------------------------------------------------------------------
def _fcnet_forward_impl(x, v_list, b_list, d_out, *, single_buffer_weights):
    num_layers = len(v_list)
    batch, d_in = x.shape
    kp0 = v_list[0].shape[0]
    np_last = v_list[-1].shape[1]
    max_width = max(max(int(s) for s in w.shape) for w in v_list)
    max_width = max(max_width, d_in)

    resident_bytes = sum(w.size * w.dtype.itemsize for w in v_list)
    resident_bytes += sum(b.size * b.dtype.itemsize for b in b_list)
    buf_mult = 1 if single_buffer_weights else 2

    vmem_cap = _vmem_capacity_bytes()
    act_budget = int(0.7 * vmem_cap) - buf_mult * resident_bytes - (8 << 20)

    # ---- batch tile: big M tiles amortize the per-step overhead ------------
    b_pad = _round_up(batch, _SUBLANE)
    tb = min(512, b_pad)
    if b_pad >= 2 * _SUBLANE:
        # Keep >= 2 grid programs when the batch permits (v7x megacore).
        tb = min(tb, _round_up((b_pad + 1) // 2, _SUBLANE))
    per_row_bytes = 4 * 4 * max_width  # in/out double-buffer + live h, f32
    while tb > _SUBLANE and tb * per_row_bytes > max(act_budget, 1 << 20):
        tb = max(_SUBLANE, _round_up(tb // 2, _SUBLANE))
    b_pad = _round_up(b_pad, tb)
    grid = (b_pad // tb,)

    # Host-side batch pad only when the batch is not already tile aligned
    # (no extra XLA pad/slice on the common aligned path).
    if b_pad != batch:
        x_in = jnp.zeros((b_pad, d_in), x.dtype).at[:batch].set(x)
    else:
        x_in = x

    needs_in_pad = d_in != kp0

    # ---- specs --------------------------------------------------------------
    wb_kwargs = {}
    if single_buffer_weights:
        # Grid-invariant weights/biases: single-buffer them (their block index
        # never changes, so default double buffering only costs VMEM).
        wb_kwargs = dict(pipeline_mode=pl.Buffered(1))

    in_specs = [pl.BlockSpec((tb, d_in), lambda i: (i, 0))]
    in_specs += [pl.BlockSpec(tuple(w.shape), lambda i: (0, 0), **wb_kwargs)
                 for w in v_list]
    in_specs += [pl.BlockSpec(tuple(b.shape), lambda i: (0, 0), **wb_kwargs)
                 for b in b_list]
    out_spec = pl.BlockSpec((tb, d_out), lambda i: (i, 0))

    scratch_shapes = []
    if needs_in_pad:
        scratch_shapes.append(pltpu.VMEM((tb, kp0), jnp.float32))

    flops = sum(2 * b_pad * int(w.shape[0]) * int(w.shape[1]) for w in v_list)
    bytes_accessed = int(x_in.size * x_in.dtype.itemsize
                         + b_pad * d_out * x.dtype.itemsize
                         + resident_bytes)

    vmem_limit = int(min(0.7 * vmem_cap,
                         max(32 << 20,
                             buf_mult * resident_bytes
                             + 4 * tb * max_width * 4 + (8 << 20))))

    kernel = _make_fcnet_kernel(num_layers, d_in, d_out, np_last, needs_in_pad)

    out = pl.pallas_call(
        kernel,
        out_shape=jax.ShapeDtypeStruct((b_pad, d_out), x.dtype),
        grid=grid,
        in_specs=in_specs,
        out_specs=out_spec,
        scratch_shapes=scratch_shapes,
        compiler_params=pltpu.CompilerParams(
            dimension_semantics=("parallel",),   # batch axis -> both TCs on v7x
            vmem_limit_bytes=vmem_limit),
        cost_estimate=pl.CostEstimate(
            flops=flops, transcendentals=0, bytes_accessed=bytes_accessed),
    )(x_in, *v_list, *b_list)

    return out[:batch] if b_pad != batch else out


def fcnet_forward(x, packed_params, out_features):
    v_list, b_list = packed_params
    try:
        out = _fcnet_forward_impl(x, v_list, b_list, out_features,
                                  single_buffer_weights=True)
        return jax.block_until_ready(out)
    except Exception:
        # pipeline_mode=pl.Buffered(1) is a newer knob; fall back to default
        # double buffering if this jax/Mosaic build rejects it.
        out = _fcnet_forward_impl(x, v_list, b_list, out_features,
                                  single_buffer_weights=False)
        return jax.block_until_ready(out)


# ----------------------------------------------------------------------------
# Reference + self-test
# ----------------------------------------------------------------------------
def fcnet_reference(x, params, weight_dtype=jnp.float32):
    """Pure-JAX reference (PyTorch semantics); weight_dtype=bfloat16 mimics
    the kernel's bf16-MXU / f32-accumulate numerics."""
    h = x
    for (v, g, bias) in params:
        w = v * (g / jnp.sqrt(jnp.sum(v * v)))       # weight_norm(dim=None)
        lhs = h.astype(weight_dtype)
        rhs = w.astype(weight_dtype).T
        h = jnp.maximum(
            jnp.dot(lhs, rhs, preferred_element_type=jnp.float32)
            + bias.astype(jnp.float32), 0.0)
    return h


if __name__ == "__main__":
    dims = [32, 64, 32]          # FCNet(dims): 32 -> 64 -> 32, ReLU after each
    batch = 8

    key = jax.random.PRNGKey(0)
    key, kx = jax.random.split(key)
    x = jax.random.normal(kx, (batch, dims[0]), jnp.float32)

    params = init_fcnet_params(dims, key)
    packed = pack_fcnet_params(params)

    out = fcnet_forward(x, packed, out_features=dims[-1])
    out = jax.block_until_ready(out)

    ref_bf16 = fcnet_reference(x, params, weight_dtype=jnp.bfloat16)
    ref_f32 = fcnet_reference(x, params, weight_dtype=jnp.float32)

    assert out.shape == (batch, dims[-1])
    assert jnp.allclose(out, ref_bf16, atol=1e-3, rtol=1e-3), \
        "mismatch vs bf16-numerics reference"
    assert jnp.allclose(out, ref_f32, atol=5e-2, rtol=5e-2), \
        "mismatch vs f32 reference"

    print("KERNEL_OK")
</pallas_src>

<mosaic_0001>
module attributes {stable_mosaic.version = 11 : i64} {
  func.func @kernel(%arg0: i32, %arg1: memref<8x32xf32, #tpu.memory_space<vmem>>, %arg2: memref<128x128xbf16, #tpu.memory_space<vmem>>, %arg3: memref<128x128xbf16, #tpu.memory_space<vmem>>, %arg4: memref<1x128xf32, #tpu.memory_space<vmem>>, %arg5: memref<1x128xf32, #tpu.memory_space<vmem>>, %arg6: memref<8x32xf32, #tpu.memory_space<vmem>>, %arg7: memref<8x128xf32, #tpu.memory_space<vmem>>) attributes {dimension_semantics = [#tpu.dimension_semantics<parallel>], iteration_bounds = array<i64: 1>, scalar_prefetch = 0 : i64, scratch_operands = 1 : i64, tpu.core_type = #tpu.core_type<tc>, window_params = [{transform_indices = @transform_0, window_bounds = array<i64: 8, 32>}, {pipeline_mode = #tpu.pipeline_mode<synchronous>, transform_indices = @transform_1, window_bounds = array<i64: 128, 128>}, {pipeline_mode = #tpu.pipeline_mode<synchronous>, transform_indices = @transform_2, window_bounds = array<i64: 128, 128>}, {pipeline_mode = #tpu.pipeline_mode<synchronous>, transform_indices = @transform_3, window_bounds = array<i64: 1, 128>}, {pipeline_mode = #tpu.pipeline_mode<synchronous>, transform_indices = @transform_4, window_bounds = array<i64: 1, 128>}, {transform_indices = @transform_5, window_bounds = array<i64: 8, 32>}]} {
    %cst = arith.constant 0.000000e+00 : f32
    %0 = vector.broadcast %cst : f32 to vector<8x128xf32>
    %c0 = arith.constant 0 : index
    %c0_0 = arith.constant 0 : index
    %1 = vector.load %arg7[%c0, %c0_0] : memref<8x128xf32, #tpu.memory_space<vmem>>, vector<8x128xf32>
    tpu.vector_store %arg7[%c0, %c0_0], %0 {strides = array<i32>} : memref<8x128xf32, #tpu.memory_space<vmem>>, vector<8x128xf32>,
    %c0_1 = arith.constant 0 : index
    %c0_2 = arith.constant 0 : index
    %2 = vector.load %arg1[%c0_1, %c0_2] : memref<8x32xf32, #tpu.memory_space<vmem>>, vector<8x32xf32>
    %c0_3 = arith.constant 0 : index
    %c0_4 = arith.constant 0 : index
    %3 = vector.load %arg7[%c0_3, %c0_4] : memref<8x128xf32, #tpu.memory_space<vmem>>, vector<8x32xf32>
    tpu.vector_store %arg7[%c0_3, %c0_4], %2 {strides = array<i32>} : memref<8x128xf32, #tpu.memory_space<vmem>>, vector<8x32xf32>,
    %c0_5 = arith.constant 0 : index
    %c0_6 = arith.constant 0 : index
    %4 = vector.load %arg7[%c0_5, %c0_6] : memref<8x128xf32, #tpu.memory_space<vmem>>, vector<8x128xf32>
    %5 = arith.truncf %4 : vector<8x128xf32> to vector<8x128xbf16>
    %c0_7 = arith.constant 0 : index
    %c0_8 = arith.constant 0 : index
    %6 = vector.load %arg2[%c0_7, %c0_8] : memref<128x128xbf16, #tpu.memory_space<vmem>>, vector<128x128xbf16>
    %cst_9 = arith.constant dense<0.000000e+00> : vector<8x128xf32>
    %7 = tpu.matmul %5, %6, %cst_9 {dimension_numbers = #tpu.dot_dimension_numbers<[1], [0], [0], [1], [0, 0, 1, 1], [], []>} : vector<8x128xbf16>, vector<128x128xbf16>, vector<8x128xf32> -> vector<8x128xf32>
    %c0_10 = arith.constant 0 : index
    %c0_11 = arith.constant 0 : index
    %8 = vector.load %arg4[%c0_10, %c0_11] : memref<1x128xf32, #tpu.memory_space<vmem>>, vector<1x128xf32>
    %9 = vector.broadcast %8 : vector<1x128xf32> to vector<8x128xf32>
    %10 = arith.addf %7, %9 : vector<8x128xf32>
    %cst_12 = arith.constant 0.000000e+00 : f32
    %11 = vector.broadcast %cst_12 : f32 to vector<8x128xf32>
    %12 = arith.maximumf %10, %11 : vector<8x128xf32>
    %13 = arith.truncf %12 : vector<8x128xf32> to vector<8x128xbf16>
    %c0_13 = arith.constant 0 : index
    %c0_14 = arith.constant 0 : index
    %14 = vector.load %arg3[%c0_13, %c0_14] : memref<128x128xbf16, #tpu.memory_space<vmem>>, vector<128x128xbf16>
    %cst_15 = arith.constant dense<0.000000e+00> : vector<8x128xf32>
    %15 = tpu.matmul %13, %14, %cst_15 {dimension_numbers = #tpu.dot_dimension_numbers<[1], [0], [0], [1], [0, 0, 1, 1], [], []>} : vector<8x128xbf16>, vector<128x128xbf16>, vector<8x128xf32> -> vector<8x128xf32>
    %c0_16 = arith.constant 0 : index
    %c0_17 = arith.constant 0 : index
    %16 = vector.load %arg5[%c0_16, %c0_17] : memref<1x128xf32, #tpu.memory_space<vmem>>, vector<1x128xf32>
    %17 = vector.broadcast %16 : vector<1x128xf32> to vector<8x128xf32>
    %18 = arith.addf %15, %17 : vector<8x128xf32>
    %cst_18 = arith.constant 0.000000e+00 : f32
    %19 = vector.broadcast %cst_18 : f32 to vector<8x128xf32>
    %20 = arith.maximumf %18, %19 : vector<8x128xf32>
    %21 = vector.extract_strided_slice %20 {offsets = [0, 0], sizes = [8, 32], strides = [1, 1]} : vector<8x128xf32> to vector<8x32xf32>
    %c0_19 = arith.constant 0 : index
    %c0_20 = arith.constant 0 : index
    %22 = vector.load %arg6[%c0_19, %c0_20] : memref<8x32xf32, #tpu.memory_space<vmem>>, vector<8x32xf32>
    tpu.vector_store %arg6[%c0_19, %c0_20], %21 {strides = array<i32>} : memref<8x32xf32, #tpu.memory_space<vmem>>, vector<8x32xf32>,
    return
  }
  func.func @transform_0(%arg0: i32) -> (i32, i32) {
    %c0_i32 = arith.constant 0 : i32
    %c0_i32_0 = arith.constant 0 : i32
    return %arg0, %c0_i32 : i32, i32
  }
  func.func @transform_1(%arg0: i32) -> (i32, i32) {
    %c0_i32 = arith.constant 0 : i32
    %c0_i32_0 = arith.constant 0 : i32
    %c0_i32_1 = arith.constant 0 : i32
    return %c0_i32, %c0_i32_0 : i32, i32
  }
  func.func @transform_2(%arg0: i32) -> (i32, i32) {
    %c0_i32 = arith.constant 0 : i32
    %c0_i32_0 = arith.constant 0 : i32
    %c0_i32_1 = arith.constant 0 : i32
    return %c0_i32, %c0_i32_0 : i32, i32
  }
  func.func @transform_3(%arg0: i32) -> (i32, i32) {
    %c0_i32 = arith.constant 0 : i32
    %c0_i32_0 = arith.constant 0 : i32
    %c0_i32_1 = arith.constant 0 : i32
    return %c0_i32, %c0_i32_0 : i32, i32
  }
  func.func @transform_4(%arg0: i32) -> (i32, i32) {
    %c0_i32 = arith.constant 0 : i32
    %c0_i32_0 = arith.constant 0 : i32
    %c0_i32_1 = arith.constant 0 : i32
    return %c0_i32, %c0_i32_0 : i32, i32
  }
  func.func @transform_5(%arg0: i32) -> (i32, i32) {
    %c0_i32 = arith.constant 0 : i32
    %c0_i32_0 = arith.constant 0 : i32
    return %arg0, %c0_i32 : i32, i32
  }
}

module attributes {stable_mosaic.version = 11 : i64} {
  func.func @kernel(%arg0: i32, %arg1: memref<8x32xf32, #tpu.memory_space<vmem>>, %arg2: memref<128x128xbf16, #tpu.memory_space<vmem>>, %arg3: memref<128x128xbf16, #tpu.memory_space<vmem>>, %arg4: memref<1x128xf32, #tpu.memory_space<vmem>>, %arg5: memref<1x128xf32, #tpu.memory_space<vmem>>, %arg6: memref<8x32xf32, #tpu.memory_space<vmem>>, %arg7: memref<8x128xf32, #tpu.memory_space<vmem>>) attributes {dimension_semantics = [#tpu.dimension_semantics<parallel>], iteration_bounds = array<i64: 1>, scalar_prefetch = 0 : i64, scratch_operands = 1 : i64, tpu.core_type = #tpu.core_type<tc>, window_params = [{transform_indices = @transform_0, window_bounds = array<i64: 8, 32>}, {pipeline_mode = #tpu.pipeline_mode<synchronous>, transform_indices = @transform_1, window_bounds = array<i64: 128, 128>}, {pipeline_mode = #tpu.pipeline_mode<synchronous>, transform_indices = @transform_2, window_bounds = array<i64: 128, 128>}, {pipeline_mode = #tpu.pipeline_mode<synchronous>, transform_indices = @transform_3, window_bounds = array<i64: 1, 128>}, {pipeline_mode = #tpu.pipeline_mode<synchronous>, transform_indices = @transform_4, window_bounds = array<i64: 1, 128>}, {transform_indices = @transform_5, window_bounds = array<i64: 8, 32>}]} {
    %cst = arith.constant 0.000000e+00 : f32
    %0 = vector.broadcast %cst : f32 to vector<8x128xf32>
    %c0 = arith.constant 0 : index
    %c0_0 = arith.constant 0 : index
    %1 = vector.load %arg7[%c0, %c0_0] : memref<8x128xf32, #tpu.memory_space<vmem>>, vector<8x128xf32>
    tpu.vector_store %arg7[%c0, %c0_0], %0 {strides = array<i32>} : memref<8x128xf32, #tpu.memory_space<vmem>>, vector<8x128xf32>,
    %c0_1 = arith.constant 0 : index
    %c0_2 = arith.constant 0 : index
    %2 = vector.load %arg1[%c0_1, %c0_2] : memref<8x32xf32, #tpu.memory_space<vmem>>, vector<8x32xf32>
    %c0_3 = arith.constant 0 : index
    %c0_4 = arith.constant 0 : index
    %3 = vector.load %arg7[%c0_3, %c0_4] : memref<8x128xf32, #tpu.memory_space<vmem>>, vector<8x32xf32>
    tpu.vector_store %arg7[%c0_3, %c0_4], %2 {strides = array<i32>} : memref<8x128xf32, #tpu.memory_space<vmem>>, vector<8x32xf32>,
    %c0_5 = arith.constant 0 : index
    %c0_6 = arith.constant 0 : index
    %4 = vector.load %arg7[%c0_5, %c0_6] : memref<8x128xf32, #tpu.memory_space<vmem>>, vector<8x128xf32>
    %5 = arith.truncf %4 : vector<8x128xf32> to vector<8x128xbf16>
    %c0_7 = arith.constant 0 : index
    %c0_8 = arith.constant 0 : index
    %6 = vector.load %arg2[%c0_7, %c0_8] : memref<128x128xbf16, #tpu.memory_space<vmem>>, vector<128x128xbf16>
    %cst_9 = arith.constant dense<0.000000e+00> : vector<8x128xf32>
    %7 = tpu.matmul %5, %6, %cst_9 {dimension_numbers = #tpu.dot_dimension_numbers<[1], [0], [0], [1], [0, 0, 1, 1], [], []>} : vector<8x128xbf16>, vector<128x128xbf16>, vector<8x128xf32> -> vector<8x128xf32>
    %c0_10 = arith.constant 0 : index
    %c0_11 = arith.constant 0 : index
    %8 = vector.load %arg4[%c0_10, %c0_11] : memref<1x128xf32, #tpu.memory_space<vmem>>, vector<1x128xf32>
    %9 = vector.broadcast %8 : vector<1x128xf32> to vector<8x128xf32>
    %10 = arith.addf %7, %9 : vector<8x128xf32>
    %cst_12 = arith.constant 0.000000e+00 : f32
    %11 = vector.broadcast %cst_12 : f32 to vector<8x128xf32>
    %12 = arith.maximumf %10, %11 : vector<8x128xf32>
    %13 = arith.truncf %12 : vector<8x128xf32> to vector<8x128xbf16>
    %c0_13 = arith.constant 0 : index
    %c0_14 = arith.constant 0 : index
    %14 = vector.load %arg3[%c0_13, %c0_14] : memref<128x128xbf16, #tpu.memory_space<vmem>>, vector<128x128xbf16>
    %cst_15 = arith.constant dense<0.000000e+00> : vector<8x128xf32>
    %15 = tpu.matmul %13, %14, %cst_15 {dimension_numbers = #tpu.dot_dimension_numbers<[1], [0], [0], [1], [0, 0, 1, 1], [], []>} : vector<8x128xbf16>, vector<128x128xbf16>, vector<8x128xf32> -> vector<8x128xf32>
    %c0_16 = arith.constant 0 : index
    %c0_17 = arith.constant 0 : index
    %16 = vector.load %arg5[%c0_16, %c0_17] : memref<1x128xf32, #tpu.memory_space<vmem>>, vector<1x128xf32>
    %17 = vector.broadcast %16 : vector<1x128xf32> to vector<8x128xf32>
    %18 = arith.addf %15, %17 : vector<8x128xf32>
    %cst_18 = arith.constant 0.000000e+00 : f32
    %19 = vector.broadcast %cst_18 : f32 to vector<8x128xf32>
    %20 = arith.maximumf %18, %19 : vector<8x128xf32>
    %21 = vector.extract_strided_slice %20 {offsets = [0, 0], sizes = [8, 32], strides = [1, 1]} : vector<8x128xf32> to vector<8x32xf32>
    %c0_19 = arith.constant 0 : index
    %c0_20 = arith.constant 0 : index
    %22 = vector.load %arg6[%c0_19, %c0_20] : memref<8x32xf32, #tpu.memory_space<vmem>>, vector<8x32xf32>
    tpu.vector_store %arg6[%c0_19, %c0_20], %21 {strides = array<i32>} : memref<8x32xf32, #tpu.memory_space<vmem>>, vector<8x32xf32>,
    return
  }
  func.func @transform_0(%arg0: i32) -> (i32, i32) {
    %c0_i32 = arith.constant 0 : i32
    %c0_i32_0 = arith.constant 0 : i32
    return %arg0, %c0_i32 : i32, i32
  }
  func.func @transform_1(%arg0: i32) -> (i32, i32) {
    %c0_i32 = arith.constant 0 : i32
    %c0_i32_0 = arith.constant 0 : i32
    %c0_i32_1 = arith.constant 0 : i32
    return %c0_i32, %c0_i32_0 : i32, i32
  }
  func.func @transform_2(%arg0: i32) -> (i32, i32) {
    %c0_i32 = arith.constant 0 : i32
    %c0_i32_0 = arith.constant 0 : i32
    %c0_i32_1 = arith.constant 0 : i32
    return %c0_i32, %c0_i32_0 : i32, i32
  }
  func.func @transform_3(%arg0: i32) -> (i32, i32) {
    %c0_i32 = arith.constant 0 : i32
    %c0_i32_0 = arith.constant 0 : i32
    %c0_i32_1 = arith.constant 0 : i32
    return %c0_i32, %c0_i32_0 : i32, i32
  }
  func.func @transform_4(%arg0: i32) -> (i32, i32) {
    %c0_i32 = arith.constant 0 : i32
    %c0_i32_0 = arith.constant 0 : i32
    %c0_i32_1 = arith.constant 0 : i32
    return %c0_i32, %c0_i32_0 : i32, i32
  }
  func.func @transform_5(%arg0: i32) -> (i32, i32) {
    %c0_i32 = arith.constant 0 : i32
    %c0_i32_0 = arith.constant 0 : i32
    return %arg0, %c0_i32 : i32, i32
  }
}

</mosaic_0001>

<llo_original>
// kernel: tpu_custom_call.1
$region0: #{tpu_custom_call.1}
  #allocation0 [shape = 'u32[]', space=smem, size = 0x4, offset = 0x4, fixed_abs, tag = 'smem constant byte address 0x4 - core index']
  #allocation1 [shape = 'u32[72,128]{1,0:T(1,128)}', space=vmem, size = 0x9000, scoped, tag = 'internal scratch']
  #allocation2 [shape = 'f32[8,128]{1,0:T(8,128)}', space=vmem, size = 0x1000, scoped, tag = 'scratch operand']
  %s0 = inlined_call_operand.hbm [shape: f32[8,32], index: 0, kind: input, shape index: {}]
  %s1 = inlined_call_operand.hbm [shape: bf16[128,128], index: 1, kind: input, shape index: {}]
  %s2 = inlined_call_operand.hbm [shape: bf16[128,128], index: 2, kind: input, shape index: {}]
  %s3 = inlined_call_operand.vmem [shape: f32[1,128], index: 3, kind: input, shape index: {}]
  %s4 = inlined_call_operand.vmem [shape: f32[1,128], index: 4, kind: input, shape index: {}]
  %s5 = inlined_call_operand.hbm [shape: f32[8,32], index: 5, kind: output, shape index: {}]
  %s6 = sld [smem:[#allocation0]]
  $region42: #{tpu_custom_call.1} parent=0
    _
  %s8 = ssub.s32 1, %s6
  %s9 = scalar_select 0, %s8, %s6
  $region1: #{tpu_custom_call.1} parent=0
    #allocation3 [shape = 'u8[4096]{0}', space=vmem, size = 0x1000, scoped, tag = 'input window, operand 0, single buffered']
    #allocation4 [shape = 's32[1]{0}', space=sflag, size = 0x4, scoped, tag = 'scoped memory for tpu_custom_call.1']
    #allocation5 [shape = 's32[1]{0}', space=sflag, size = 0x4, scoped, tag = 'scoped memory for tpu_custom_call.1']
    #allocation6 [shape = 'u8[32768]{0}', space=vmem, size = 0x8000, scoped, tag = 'input window, operand 1, single buffered']
    #allocation7 [shape = 's32[1]{0}', space=sflag, size = 0x4, scoped, tag = 'scoped memory for tpu_custom_call.1']
    #allocation8 [shape = 'u8[32768]{0}', space=vmem, size = 0x8000, scoped, tag = 'input window, operand 2, single buffered']
    #allocation9 [shape = 'u8[4096]{0}', space=vmem, size = 0x1000, scoped, tag = 'output window, operand 0, single buffered']
    %10 = vsyncpa [#allocation4], 0
    %11 = vsyncpa [#allocation7], 0
    %12 = vsyncpa [#allocation5], 0
    // Predicated region
    $region2: #{tpu_custom_call.1} parent=1 // pred_check
      _
    $region3: #{tpu_custom_call.1} parent=1 // pred_check_branch
      %14 = sbr.rel (0) target = $region5
    $region4: #{tpu_custom_call.1} parent=1 // pred_region
      %16 = vsyncadd [#allocation4], 0
      %s18 = sshll.u32 %s0, 4
      %s19 = int_to_ptr.hbm [resolvable:$true] %s18
      %s20 = sshll.u32 [#allocation3], 4
      %s21 = int_to_ptr.vmem [resolvable:$true] %s20
      %23 = dma.hbm_to_vmem [thread:$0]  %s19, 128, %s21, [#allocation4]
    $region5: #{tpu_custom_call.1} parent=1 // pred_fallthru
      _
    // Predicated region
    $region6: #{tpu_custom_call.1} parent=1 // pred_check
      _
    $region7: #{tpu_custom_call.1} parent=1 // pred_check_branch
      %25 = sbr.rel (0) target = $region9
    $region8: #{tpu_custom_call.1} parent=1 // pred_region
      %27 = vsyncadd [#allocation7], 0
      %s28 = sshll.u32 %s1, 4
      %s29 = int_to_ptr.hbm [resolvable:$true] %s28
      %s30 = sshll.u32 [#allocation6], 4
      %s31 = int_to_ptr.vmem [resolvable:$true] %s30
      %36 = dma.hbm_to_vmem [thread:$0]  %s29, 1024, %s31, [#allocation7], 64, 64, 4
    $region9: #{tpu_custom_call.1} parent=1 // pred_fallthru
      _
    // Predicated region
    $region10: #{tpu_custom_call.1} parent=1 // pred_check
      _
    $region11: #{tpu_custom_call.1} parent=1 // pred_check_branch
      %38 = sbr.rel (0) target = $region13
    $region12: #{tpu_custom_call.1} parent=1 // pred_region
      %40 = vsyncadd [#allocation7], 0
      %s41 = sshll.u32 %s2, 4
      %s42 = int_to_ptr.hbm [resolvable:$true] %s41
      %s43 = sshll.u32 [#allocation8], 4
      %s44 = int_to_ptr.vmem [resolvable:$true] %s43
      %49 = dma.hbm_to_vmem [thread:$0]  %s42, 1024, %s44, [#allocation7], 64, 64, 4
    $region13: #{tpu_custom_call.1} parent=1 // pred_fallthru
      _
    // Predicated region
    $region14: #{tpu_custom_call.1} parent=1 // pred_check
      _
    $region15: #{tpu_custom_call.1} parent=1 // pred_check_branch
      %51 = sbr.rel (0) target = $region17
    $region16: #{tpu_custom_call.1} parent=1 // pred_region
      _
    $region17: #{tpu_custom_call.1} parent=1 // pred_fallthru
      _
    // Predicated region
    $region18: #{tpu_custom_call.1} parent=1 // pred_check
      _
    $region19: #{tpu_custom_call.1} parent=1 // pred_check_branch
      %53 = sbr.rel (0) target = $region21
    $region20: #{tpu_custom_call.1} parent=1 // pred_region
      _
    $region21: #{tpu_custom_call.1} parent=1 // pred_fallthru
      _
    // Predicated region
    $region22: #{tpu_custom_call.1} parent=1 // pred_check
      _
    $region23: #{tpu_custom_call.1} parent=1 // pred_check_branch
      %55 = sbr.rel (0) target = $region25
    $region24: #{tpu_custom_call.1} parent=1 // pred_region
      %57 = dma.done [#allocation4], 128
    $region25: #{tpu_custom_call.1} parent=1 // pred_fallthru
      _
    // Predicated region
    $region26: #{tpu_custom_call.1} parent=1 // pred_check
      _
    $region27: #{tpu_custom_call.1} parent=1 // pred_check_branch
      %59 = sbr.rel (0) target = $region29
    $region28: #{tpu_custom_call.1} parent=1 // pred_region
      %61 = dma.done [#allocation7], 1024
    $region29: #{tpu_custom_call.1} parent=1 // pred_fallthru
      _
    // Predicated region
    $region30: #{tpu_custom_call.1} parent=1 // pred_check
      _
    $region31: #{tpu_custom_call.1} parent=1 // pred_check_branch
      %63 = sbr.rel (0) target = $region33
    $region32: #{tpu_custom_call.1} parent=1 // pred_region
      %65 = dma.done [#allocation7], 1024
    $region33: #{tpu_custom_call.1} parent=1 // pred_fallthru
      _
    %66 = vst [vmem:[#allocation2] sm:$0xff] 0.0
    %v67 = vld [vmem:[#allocation3] sm:$0xff]
    %vm68 = vcmask 261120
    %69 = vst.msk [vmem:[#allocation2] sm:$0xff] %vm68, %v67
    %v70 = vld [vmem:[#allocation2] sm:$0xff]
    %v71 = vpack.c.bf16 %v70, %v70
    %v72 = vld [vmem:[#allocation6] sm:$0xf]
    %v73 = vld [vmem:[#allocation6 + $0x4] sm:$0xf]
    %v74 = vld [vmem:[#allocation6 + $0x8] sm:$0xf]
    %v75 = vld [vmem:[#allocation6 + $0xc] sm:$0xf]
    %v76 = vld [vmem:[#allocation6 + $0x10] sm:$0xf]
    %v77 = vld [vmem:[#allocation6 + $0x14] sm:$0xf]
    %v78 = vld [vmem:[#allocation6 + $0x18] sm:$0xf]
    %v79 = vld [vmem:[#allocation6 + $0x1c] sm:$0xf]
    %v80 = vld [vmem:[#allocation6 + $0x20] sm:$0xf]
    %v81 = vld [vmem:[#allocation6 + $0x24] sm:$0xf]
    %v82 = vld [vmem:[#allocation6 + $0x28] sm:$0xf]
    %v83 = vld [vmem:[#allocation6 + $0x2c] sm:$0xf]
    %v84 = vld [vmem:[#allocation6 + $0x30] sm:$0xf]
    %v85 = vld [vmem:[#allocation6 + $0x34] sm:$0xf]
    %v86 = vld [vmem:[#allocation6 + $0x38] sm:$0xf]
    %v87 = vld [vmem:[#allocation6 + $0x3c] sm:$0xf]
    %v88 = vld [vmem:[%s3] sm:$0x1]
    %v90 = vperm.slane %v88, 0
    %v108 = vunpack.c.l.b16 %v72
    %v109 = vunpack.c.l.b16 %v73
    %v110 = vunpack.c.l.b16 %v74
    %v111 = vunpack.c.l.b16 %v75
    %v112 = vunpack.c.l.b16 %v76
    %v113 = vunpack.c.l.b16 %v77
    %v114 = vunpack.c.l.b16 %v78
    %v115 = vunpack.c.l.b16 %v79
    %v116 = vunpack.c.l.b16 %v80
    %v117 = vunpack.c.l.b16 %v81
    %v118 = vunpack.c.l.b16 %v82
    %v119 = vunpack.c.l.b16 %v83
    %v120 = vunpack.c.l.b16 %v84
    %v121 = vunpack.c.l.b16 %v85
    %v122 = vunpack.c.l.b16 %v86
    %v123 = vunpack.c.l.b16 %v87
    %v124 = vpack.c.b16 %v109, %v108
    %v125 = vpack.c.b16 %v111, %v110
    %v126 = vpack.c.b16 %v113, %v112
    %v127 = vpack.c.b16 %v115, %v114
    %v128 = vpack.c.b16 %v117, %v116
    %v129 = vpack.c.b16 %v119, %v118
    %v130 = vpack.c.b16 %v121, %v120
    %v131 = vpack.c.b16 %v123, %v122
    %140 = vmatpush.bf16.msra.mxu0 %v131
    %141 = vmatpush.bf16.msra.mxu0 %v130
    %142 = vmatpush.bf16.msra.mxu0 %v129
    %143 = vmatpush.bf16.msra.mxu0 %v128
    %144 = vmatpush.bf16.msra.mxu0 %v127
    %145 = vmatpush.bf16.msra.mxu0 %v126
    %146 = vmatpush.bf16.msra.mxu0 %v125
    %147 = vmatpush.bf16.msra.mxu0 %v124
    %148 = vmatmul.bf16.gmra.mxu0 %v71
    %v149 = vpop.f32.mrf.mxu0
    %v150 = vadd.f32 %v90, %v149
    %v151 = vpop.f32.mrf.mxu0
    %152 = vdwg.mxu0
    %v153 = vmax.f32 %v150, 0.0
    %v154 = vpack.c.bf16 %v153, %v153
    %v155 = vld [vmem:[#allocation8] sm:$0xf]
    %v156 = vld [vmem:[#allocation8 + $0x4] sm:$0xf]
    %v157 = vld [vmem:[#allocation8 + $0x8] sm:$0xf]
    %v158 = vld [vmem:[#allocation8 + $0xc] sm:$0xf]
    %v159 = vld [vmem:[#allocation8 + $0x10] sm:$0xf]
    %v160 = vld [vmem:[#allocation8 + $0x14] sm:$0xf]
    %v161 = vld [vmem:[#allocation8 + $0x18] sm:$0xf]
    %v162 = vld [vmem:[#allocation8 + $0x1c] sm:$0xf]
    %v163 = vld [vmem:[#allocation8 + $0x20] sm:$0xf]
    %v164 = vld [vmem:[#allocation8 + $0x24] sm:$0xf]
    %v165 = vld [vmem:[#allocation8 + $0x28] sm:$0xf]
    %v166 = vld [vmem:[#allocation8 + $0x2c] sm:$0xf]
    %v167 = vld [vmem:[#allocation8 + $0x30] sm:$0xf]
    %v168 = vld [vmem:[#allocation8 + $0x34] sm:$0xf]
    %v169 = vld [vmem:[#allocation8 + $0x38] sm:$0xf]
    %v170 = vld [vmem:[#allocation8 + $0x3c] sm:$0xf]
    %v171 = vld [vmem:[%s4] sm:$0x1]
    %v173 = vperm.slane %v171, 0
    %v191 = vunpack.c.l.b16 %v155
    %v192 = vunpack.c.l.b16 %v156
    %v193 = vunpack.c.l.b16 %v157
    %v194 = vunpack.c.l.b16 %v158
    %v195 = vunpack.c.l.b16 %v159
    %v196 = vunpack.c.l.b16 %v160
    %v197 = vunpack.c.l.b16 %v161
    %v198 = vunpack.c.l.b16 %v162
    %v199 = vunpack.c.l.b16 %v163
    %v200 = vunpack.c.l.b16 %v164
    %v201 = vunpack.c.l.b16 %v165
    %v202 = vunpack.c.l.b16 %v166
    %v203 = vunpack.c.l.b16 %v167
    %v204 = vunpack.c.l.b16 %v168
    %v205 = vunpack.c.l.b16 %v169
    %v206 = vunpack.c.l.b16 %v170
    %v207 = vpack.c.b16 %v192, %v191
    %v208 = vpack.c.b16 %v194, %v193
    %v209 = vpack.c.b16 %v196, %v195
    %v210 = vpack.c.b16 %v198, %v197
    %v211 = vpack.c.b16 %v200, %v199
    %v212 = vpack.c.b16 %v202, %v201
    %v213 = vpack.c.b16 %v204, %v203
    %v214 = vpack.c.b16 %v206, %v205
    %223 = vmatpush.bf16.msra.mxu0 %v214
    %224 = vmatpush.bf16.msra.mxu0 %v213
    %225 = vmatpush.bf16.msra.mxu0 %v212
    %226 = vmatpush.bf16.msra.mxu0 %v211
    %227 = vmatpush.bf16.msra.mxu0 %v210
    %228 = vmatpush.bf16.msra.mxu0 %v209
    %229 = vmatpush.bf16.msra.mxu0 %v208
    %230 = vmatpush.bf16.msra.mxu0 %v207
    %231 = vmatmul.bf16.gmra.mxu0 %v154
    %v232 = vpop.f32.mrf.mxu0
    %v233 = vadd.f32 %v173, %v232
    %v234 = vpop.f32.mrf.mxu0
    %235 = vdwg.mxu0
    %v236 = vmax.f32 %v233, 0.0
    %237 = vst.msk [vmem:[#allocation9] sm:$0xff] %vm68, %v236
    // Predicated region
    $region34: #{tpu_custom_call.1} parent=1 // pred_check
      _
    $region35: #{tpu_custom_call.1} parent=1 // pred_check_branch
      %239 = sbr.rel (0) target = $region37
    $region36: #{tpu_custom_call.1} parent=1 // pred_region
      %241 = vsyncadd [#allocation5], 0
      %s243 = sshll.u32 [#allocation9], 4
      %s244 = int_to_ptr.vmem [resolvable:$true] %s243
      %s245 = sshll.u32 %s5, 4
      %s246 = int_to_ptr.hbm [resolvable:$true] %s245
      %248 = dma.vmem_to_hbm [thread:$0]  %s244, 128, %s246, [#allocation5]
    $region37: #{tpu_custom_call.1} parent=1 // pred_fallthru
      _
    // Predicated region
    $region38: #{tpu_custom_call.1} parent=1 // pred_check
      _
    $region39: #{tpu_custom_call.1} parent=1 // pred_check_branch
      %250 = sbr.rel (0) target = $region41
    $region40: #{tpu_custom_call.1} parent=1 // pred_region
      %252 = dma.done [#allocation5], 128
    $region41: #{tpu_custom_call.1} parent=1 // pred_fallthru
      _
    %253 = vsyncpa [#allocation4], 1
    %254 = vsyncpa [#allocation7], 1
    %255 = vsyncpa [#allocation5], 1

// kernel: tpu_custom_call.1
$region0: #{tpu_custom_call.1}
  #allocation0 [shape = 'u32[]', space=smem, size = 0x4, offset = 0x4, fixed_abs, tag = 'smem constant byte address 0x4 - core index']
  #allocation1 [shape = 'u32[72,128]{1,0:T(1,128)}', space=vmem, size = 0x9000, scoped, tag = 'internal scratch']
  #allocation2 [shape = 'f32[8,128]{1,0:T(8,128)}', space=vmem, size = 0x1000, scoped, tag = 'scratch operand']
  %s0 = inlined_call_operand.hbm [shape: f32[8,32], index: 0, kind: input, shape index: {}]
  %s1 = inlined_call_operand.hbm [shape: bf16[128,128], index: 1, kind: input, shape index: {}]
  %s2 = inlined_call_operand.hbm [shape: bf16[128,128], index: 2, kind: input, shape index: {}]
  %s3 = inlined_call_operand.vmem [shape: f32[1,128], index: 3, kind: input, shape index: {}]
  %s4 = inlined_call_operand.vmem [shape: f32[1,128], index: 4, kind: input, shape index: {}]
  %s5 = inlined_call_operand.hbm [shape: f32[8,32], index: 5, kind: output, shape index: {}]
  %s6 = sld [smem:[#allocation0]]
  $region42: #{tpu_custom_call.1} parent=0
    _
  %s8 = ssub.s32 1, %s6
  %s9 = scalar_select 0, %s8, %s6
  $region1: #{tpu_custom_call.1} parent=0
    #allocation3 [shape = 'u8[4096]{0}', space=vmem, size = 0x1000, scoped, tag = 'input window, operand 0, single buffered']
    #allocation4 [shape = 's32[1]{0}', space=sflag, size = 0x4, scoped, tag = 'scoped memory for tpu_custom_call.1']
    #allocation5 [shape = 's32[1]{0}', space=sflag, size = 0x4, scoped, tag = 'scoped memory for tpu_custom_call.1']
    #allocation6 [shape = 'u8[32768]{0}', space=vmem, size = 0x8000, scoped, tag = 'input window, operand 1, single buffered']
    #allocation7 [shape = 's32[1]{0}', space=sflag, size = 0x4, scoped, tag = 'scoped memory for tpu_custom_call.1']
    #allocation8 [shape = 'u8[32768]{0}', space=vmem, size = 0x8000, scoped, tag = 'input window, operand 2, single buffered']
    #allocation9 [shape = 'u8[4096]{0}', space=vmem, size = 0x1000, scoped, tag = 'output window, operand 0, single buffered']
    %10 = vsyncpa [#allocation4], 0
    %11 = vsyncpa [#allocation7], 0
    %12 = vsyncpa [#allocation5], 0
    // Predicated region
    $region2: #{tpu_custom_call.1} parent=1 // pred_check
      _
    $region3: #{tpu_custom_call.1} parent=1 // pred_check_branch
      %14 = sbr.rel (0) target = $region5
    $region4: #{tpu_custom_call.1} parent=1 // pred_region
      %16 = vsyncadd [#allocation4], 0
      %s18 = sshll.u32 %s0, 4
      %s19 = int_to_ptr.hbm [resolvable:$true] %s18
      %s20 = sshll.u32 [#allocation3], 4
      %s21 = int_to_ptr.vmem [resolvable:$true] %s20
      %23 = dma.hbm_to_vmem [thread:$0]  %s19, 128, %s21, [#allocation4]
    $region5: #{tpu_custom_call.1} parent=1 // pred_fallthru
      _
    // Predicated region
    $region6: #{tpu_custom_call.1} parent=1 // pred_check
      _
    $region7: #{tpu_custom_call.1} parent=1 // pred_check_branch
      %25 = sbr.rel (0) target = $region9
    $region8: #{tpu_custom_call.1} parent=1 // pred_region
      %27 = vsyncadd [#allocation7], 0
      %s28 = sshll.u32 %s1, 4
      %s29 = int_to_ptr.hbm [resolvable:$true] %s28
      %s30 = sshll.u32 [#allocation6], 4
      %s31 = int_to_ptr.vmem [resolvable:$true] %s30
      %36 = dma.hbm_to_vmem [thread:$0]  %s29, 1024, %s31, [#allocation7], 64, 64, 4
    $region9: #{tpu_custom_call.1} parent=1 // pred_fallthru
      _
    // Predicated region
    $region10: #{tpu_custom_call.1} parent=1 // pred_check
      _
    $region11: #{tpu_custom_call.1} parent=1 // pred_check_branch
      %38 = sbr.rel (0) target = $region13
    $region12: #{tpu_custom_call.1} parent=1 // pred_region
      %40 = vsyncadd [#allocation7], 0
      %s41 = sshll.u32 %s2, 4
      %s42 = int_to_ptr.hbm [resolvable:$true] %s41
      %s43 = sshll.u32 [#allocation8], 4
      %s44 = int_to_ptr.vmem [resolvable:$true] %s43
      %49 = dma.hbm_to_vmem [thread:$0]  %s42, 1024, %s44, [#allocation7], 64, 64, 4
    $region13: #{tpu_custom_call.1} parent=1 // pred_fallthru
      _
    // Predicated region
    $region14: #{tpu_custom_call.1} parent=1 // pred_check
      _
    $region15: #{tpu_custom_call.1} parent=1 // pred_check_branch
      %51 = sbr.rel (0) target = $region17
    $region16: #{tpu_custom_call.1} parent=1 // pred_region
      _
    $region17: #{tpu_custom_call.1} parent=1 // pred_fallthru
      _
    // Predicated region
    $region18: #{tpu_custom_call.1} parent=1 // pred_check
      _
    $region19: #{tpu_custom_call.1} parent=1 // pred_check_branch
      %53 = sbr.rel (0) target = $region21
    $region20: #{tpu_custom_call.1} parent=1 // pred_region
      _
    $region21: #{tpu_custom_call.1} parent=1 // pred_fallthru
      _
    // Predicated region
    $region22: #{tpu_custom_call.1} parent=1 // pred_check
      _
    $region23: #{tpu_custom_call.1} parent=1 // pred_check_branch
      %55 = sbr.rel (0) target = $region25
    $region24: #{tpu_custom_call.1} parent=1 // pred_region
      %57 = dma.done [#allocation4], 128
    $region25: #{tpu_custom_call.1} parent=1 // pred_fallthru
      _
    // Predicated region
    $region26: #{tpu_custom_call.1} parent=1 // pred_check
      _
    $region27: #{tpu_custom_call.1} parent=1 // pred_check_branch
      %59 = sbr.rel (0) target = $region29
    $region28: #{tpu_custom_call.1} parent=1 // pred_region
      %61 = dma.done [#allocation7], 1024
    $region29: #{tpu_custom_call.1} parent=1 // pred_fallthru
      _
    // Predicated region
    $region30: #{tpu_custom_call.1} parent=1 // pred_check
      _
    $region31: #{tpu_custom_call.1} parent=1 // pred_check_branch
      %63 = sbr.rel (0) target = $region33
    $region32: #{tpu_custom_call.1} parent=1 // pred_region
      %65 = dma.done [#allocation7], 1024
    $region33: #{tpu_custom_call.1} parent=1 // pred_fallthru
      _
    %66 = vst [vmem:[#allocation2] sm:$0xff] 0.0
    %v67 = vld [vmem:[#allocation3] sm:$0xff]
    %vm68 = vcmask 261120
    %69 = vst.msk [vmem:[#allocation2] sm:$0xff] %vm68, %v67
    %v70 = vld [vmem:[#allocation2] sm:$0xff]
    %v71 = vpack.c.bf16 %v70, %v70
    %v72 = vld [vmem:[#allocation6] sm:$0xf]
    %v73 = vld [vmem:[#allocation6 + $0x4] sm:$0xf]
    %v74 = vld [vmem:[#allocation6 + $0x8] sm:$0xf]
    %v75 = vld [vmem:[#allocation6 + $0xc] sm:$0xf]
    %v76 = vld [vmem:[#allocation6 + $0x10] sm:$0xf]
    %v77 = vld [vmem:[#allocation6 + $0x14] sm:$0xf]
    %v78 = vld [vmem:[#allocation6 + $0x18] sm:$0xf]
    %v79 = vld [vmem:[#allocation6 + $0x1c] sm:$0xf]
    %v80 = vld [vmem:[#allocation6 + $0x20] sm:$0xf]
    %v81 = vld [vmem:[#allocation6 + $0x24] sm:$0xf]
    %v82 = vld [vmem:[#allocation6 + $0x28] sm:$0xf]
    %v83 = vld [vmem:[#allocation6 + $0x2c] sm:$0xf]
    %v84 = vld [vmem:[#allocation6 + $0x30] sm:$0xf]
    %v85 = vld [vmem:[#allocation6 + $0x34] sm:$0xf]
    %v86 = vld [vmem:[#allocation6 + $0x38] sm:$0xf]
    %v87 = vld [vmem:[#allocation6 + $0x3c] sm:$0xf]
    %v88 = vld [vmem:[%s3] sm:$0x1]
    %v90 = vperm.slane %v88, 0
    %v108 = vunpack.c.l.b16 %v72
    %v109 = vunpack.c.l.b16 %v73
    %v110 = vunpack.c.l.b16 %v74
    %v111 = vunpack.c.l.b16 %v75
    %v112 = vunpack.c.l.b16 %v76
    %v113 = vunpack.c.l.b16 %v77
    %v114 = vunpack.c.l.b16 %v78
    %v115 = vunpack.c.l.b16 %v79
    %v116 = vunpack.c.l.b16 %v80
    %v117 = vunpack.c.l.b16 %v81
    %v118 = vunpack.c.l.b16 %v82
    %v119 = vunpack.c.l.b16 %v83
    %v120 = vunpack.c.l.b16 %v84
    %v121 = vunpack.c.l.b16 %v85
    %v122 = vunpack.c.l.b16 %v86
    %v123 = vunpack.c.l.b16 %v87
    %v124 = vpack.c.b16 %v109, %v108
    %v125 = vpack.c.b16 %v111, %v110
    %v126 = vpack.c.b16 %v113, %v112
    %v127 = vpack.c.b16 %v115, %v114
    %v128 = vpack.c.b16 %v117, %v116
    %v129 = vpack.c.b16 %v119, %v118
    %v130 = vpack.c.b16 %v121, %v120
    %v131 = vpack.c.b16 %v123, %v122
    %140 = vmatpush.bf16.msra.mxu0 %v131
    %141 = vmatpush.bf16.msra.mxu0 %v130
    %142 = vmatpush.bf16.msra.mxu0 %v129
    %143 = vmatpush.bf16.msra.mxu0 %v128
    %144 = vmatpush.bf16.msra.mxu0 %v127
    %145 = vmatpush.bf16.msra.mxu0 %v126
    %146 = vmatpush.bf16.msra.mxu0 %v125
    %147 = vmatpush.bf16.msra.mxu0 %v124
    %148 = vmatmul.bf16.gmra.mxu0 %v71
    %v149 = vpop.f32.mrf.mxu0
    %v150 = vadd.f32 %v90, %v149
    %v151 = vpop.f32.mrf.mxu0
    %152 = vdwg.mxu0
    %v153 = vmax.f32 %v150, 0.0
    %v154 = vpack.c.bf16 %v153, %v153
    %v155 = vld [vmem:[#allocation8] sm:$0xf]
    %v156 = vld [vmem:[#allocation8 + $0x4] sm:$0xf]
    %v157 = vld [vmem:[#allocation8 + $0x8] sm:$0xf]
    %v158 = vld [vmem:[#allocation8 + $0xc] sm:$0xf]
    %v159 = vld [vmem:[#allocation8 + $0x10] sm:$0xf]
    %v160 = vld [vmem:[#allocation8 + $0x14] sm:$0xf]
    %v161 = vld [vmem:[#allocation8 + $0x18] sm:$0xf]
    %v162 = vld [vmem:[#allocation8 + $0x1c] sm:$0xf]
    %v163 = vld [vmem:[#allocation8 + $0x20] sm:$0xf]
    %v164 = vld [vmem:[#allocation8 + $0x24] sm:$0xf]
    %v165 = vld [vmem:[#allocation8 + $0x28] sm:$0xf]
    %v166 = vld [vmem:[#allocation8 + $0x2c] sm:$0xf]
    %v167 = vld [vmem:[#allocation8 + $0x30] sm:$0xf]
    %v168 = vld [vmem:[#allocation8 + $0x34] sm:$0xf]
    %v169 = vld [vmem:[#allocation8 + $0x38] sm:$0xf]
    %v170 = vld [vmem:[#allocation8 + $0x3c] sm:$0xf]
    %v171 = vld [vmem:[%s4] sm:$0x1]
    %v173 = vperm.slane %v171, 0
    %v191 = vunpack.c.l.b16 %v155
    %v192 = vunpack.c.l.b16 %v156
    %v193 = vunpack.c.l.b16 %v157
    %v194 = vunpack.c.l.b16 %v158
    %v195 = vunpack.c.l.b16 %v159
    %v196 = vunpack.c.l.b16 %v160
    %v197 = vunpack.c.l.b16 %v161
    %v198 = vunpack.c.l.b16 %v162
    %v199 = vunpack.c.l.b16 %v163
    %v200 = vunpack.c.l.b16 %v164
    %v201 = vunpack.c.l.b16 %v165
    %v202 = vunpack.c.l.b16 %v166
    %v203 = vunpack.c.l.b16 %v167
    %v204 = vunpack.c.l.b16 %v168
    %v205 = vunpack.c.l.b16 %v169
    %v206 = vunpack.c.l.b16 %v170
    %v207 = vpack.c.b16 %v192, %v191
    %v208 = vpack.c.b16 %v194, %v193
    %v209 = vpack.c.b16 %v196, %v195
    %v210 = vpack.c.b16 %v198, %v197
    %v211 = vpack.c.b16 %v200, %v199
    %v212 = vpack.c.b16 %v202, %v201
    %v213 = vpack.c.b16 %v204, %v203
    %v214 = vpack.c.b16 %v206, %v205
    %223 = vmatpush.bf16.msra.mxu0 %v214
    %224 = vmatpush.bf16.msra.mxu0 %v213
    %225 = vmatpush.bf16.msra.mxu0 %v212
    %226 = vmatpush.bf16.msra.mxu0 %v211
    %227 = vmatpush.bf16.msra.mxu0 %v210
    %228 = vmatpush.bf16.msra.mxu0 %v209
    %229 = vmatpush.bf16.msra.mxu0 %v208
    %230 = vmatpush.bf16.msra.mxu0 %v207
    %231 = vmatmul.bf16.gmra.mxu0 %v154
    %v232 = vpop.f32.mrf.mxu0
    %v233 = vadd.f32 %v173, %v232
    %v234 = vpop.f32.mrf.mxu0
    %235 = vdwg.mxu0
    %v236 = vmax.f32 %v233, 0.0
    %237 = vst.msk [vmem:[#allocation9] sm:$0xff] %vm68, %v236
    // Predicated region
    $region34: #{tpu_custom_call.1} parent=1 // pred_check
      _
    $region35: #{tpu_custom_call.1} parent=1 // pred_check_branch
      %239 = sbr.rel (0) target = $region37
    $region36: #{tpu_custom_call.1} parent=1 // pred_region
      %241 = vsyncadd [#allocation5], 0
      %s243 = sshll.u32 [#allocation9], 4
      %s244 = int_to_ptr.vmem [resolvable:$true] %s243
      %s245 = sshll.u32 %s5, 4
      %s246 = int_to_ptr.hbm [resolvable:$true] %s245
      %248 = dma.vmem_to_hbm [thread:$0]  %s244, 128, %s246, [#allocation5]
    $region37: #{tpu_custom_call.1} parent=1 // pred_fallthru
      _
    // Predicated region
    $region38: #{tpu_custom_call.1} parent=1 // pred_check
      _
    $region39: #{tpu_custom_call.1} parent=1 // pred_check_branch
      %250 = sbr.rel (0) target = $region41
    $region40: #{tpu_custom_call.1} parent=1 // pred_region
      %252 = dma.done [#allocation5], 128
    $region41: #{tpu_custom_call.1} parent=1 // pred_fallthru
      _
    %253 = vsyncpa [#allocation4], 1
    %254 = vsyncpa [#allocation7], 1
    %255 = vsyncpa [#allocation5], 1

</llo_original>
